<compile_context>
chip_gen: v6e
topology: v6e:2x2x1
jax: 0.10.0
libtpu: 0.0.40
codegen_flags: <defaults>
</compile_context>

<pallas_src>
import numpy as np
import jax
import jax.numpy as jnp
from jax.experimental import pallas as pl
from jax.experimental.pallas import tpu as pltpu


def hr2msi_kernel(w_ref, x_ref, o_ref):
    # w_ref: (C_msi, C_hsi)  spectral-response weights, band-sum-normalized (resident)
    # x_ref: (C_hsi, TP)     pixel tile (batch dim squeezed): channels x pixels
    # o_ref: (C_msi, TP)
    acc = jnp.dot(w_ref[...], x_ref[...], preferred_element_type=jnp.float32)
    o_ref[...] = jnp.clip(acc, 0.0, 1.0).astype(o_ref.dtype)


def convolution_hr2msi_pallas(x_nchw, weights_per_band, sp_range, *,
                              tile_pixels=None, input_dtype=None):
    """x_nchw: (N, C_hsi, H, W) float32.
    weights_per_band: list of (len_band,) arrays (squeezed 1x1 conv weights).
    sp_range: (C_msi, 2) int array of inclusive [start, end] channel ranges.
    tile_pixels: optional pixel-tile override (rounded to a multiple of 128);
        default = largest tile the VMEM budget allows.
    input_dtype: optional lower-precision dtype (e.g. jnp.bfloat16) for x and W.
        Accumulate/clamp/output stay float32; halves input HBM traffic but is a
        small semantic deviation from the f32 reference, hence off by default."""
    N, C_hsi, H, W = x_nchw.shape
    C_msi = int(sp_range.shape[0])
    HW = H * W

    # Dense weight matrix with the band-sum division folded in (host-side glue).
    W_dense = np.zeros((C_msi, C_hsi), dtype=np.float32)
    for i in range(C_msi):
        lo, hi = int(sp_range[i, 0]), int(sp_range[i, 1])
        w_i = np.asarray(weights_per_band[i], dtype=np.float32)
        W_dense[i, lo:hi + 1] = w_i / w_i.sum()

    in_dtype = jnp.dtype(input_dtype) if input_dtype is not None else jnp.dtype(x_nchw.dtype)
    W_dense = jnp.asarray(W_dense, dtype=in_dtype)

    # NCHW -> (N, C_hsi, H*W): pure reshape, pixels stay lane-dense. No pixel
    # padding: ragged last tiles are fine (masked boundary writes, OOB input
    # lanes only affect their own masked-out output columns).
    x_flat = x_nchw.reshape(N, C_hsi, HW).astype(in_dtype)

    # ---- Tile sizing: memory-bound, so go as big as VMEM allows. ----
    try:
        vmem_cap = int(pltpu.get_tpu_info().vmem_capacity_bytes)
    except Exception:
        vmem_cap = 64 * 1024 * 1024          # conservative fallback (v7x physical)
    vmem_budget = (vmem_cap * 5) // 8        # ~80 MiB on v5e/v6e, ~40 MiB on v7x
    vmem_limit = min(vmem_cap, vmem_budget + (8 << 20))

    x_bufs = 3                               # Buffered(3) on the x input (below)
    per_pixel_bytes = x_bufs * C_hsi * in_dtype.itemsize + 2 * C_msi * 4
    max_tp = max(128, (vmem_budget // per_pixel_bytes) // 128 * 128)

    tp = max_tp if tile_pixels is None else int(tile_pixels)
    tp = min(tp, max_tp, pl.cdiv(HW, 128) * 128)
    tp = max(128, (tp // 128) * 128)

    # Megacore balance (v7x has 2 TensorCores): keep enough parallel grid points
    # for both cores, but never shrink tiles below 512 pixels (per-step overhead).
    min_grid, min_tp = 8, 512
    if N * pl.cdiv(HW, tp) < min_grid:
        tiles_wanted = pl.cdiv(min_grid, N)
        tp_for_grid = pl.cdiv(pl.cdiv(HW, tiles_wanted), 128) * 128
        tp = max(128, min(tp, max(tp_for_grid, min_tp)))

    grid = (N, pl.cdiv(HW, tp))

    cost = pl.CostEstimate(
        flops=2 * C_msi * C_hsi * N * HW,
        transcendentals=0,
        bytes_accessed=(in_dtype.itemsize * C_hsi + 4 * C_msi) * N * HW
                       + in_dtype.itemsize * C_msi * C_hsi,
    )

    def build(use_buffered):
        x_kwargs = dict(pipeline_mode=pl.Buffered(3)) if use_buffered else {}
        return pl.pallas_call(
            hr2msi_kernel,
            out_shape=jax.ShapeDtypeStruct((N, C_msi, HW), jnp.float32),
            grid_spec=pltpu.PrefetchScalarGridSpec(
                num_scalar_prefetch=0,
                grid=grid,
                in_specs=[
                    # Full (tiny) weight matrix, resident every step.
                    pl.BlockSpec((C_msi, C_hsi), lambda n, t: (0, 0)),
                    # One batch element x one pixel tile; batch dim squeezed away.
                    pl.BlockSpec((pl.Squeezed(), C_hsi, tp),
                                 lambda n, t: (n, 0, t), **x_kwargs),
                ],
                out_specs=pl.BlockSpec((pl.Squeezed(), C_msi, tp),
                                       lambda n, t: (n, 0, t)),
            ),
            compiler_params=pltpu.CompilerParams(
                dimension_semantics=("parallel", "parallel"),
                vmem_limit_bytes=vmem_limit),
            cost_estimate=cost,
        )

    try:
        out_flat = jax.block_until_ready(build(True)(W_dense, x_flat))
    except Exception:
        # Fallback if this JAX/Mosaic build rejects pipeline_mode=pl.Buffered(3).
        out_flat = jax.block_until_ready(build(False)(W_dense, x_flat))

    return out_flat.reshape(N, C_msi, H, W)


def convolution_hr2msi_ref(x_nchw, weights_per_band, sp_range):
    """Pure-JAX reference mirroring the PyTorch loop exactly."""
    outs = []
    for i in range(sp_range.shape[0]):
        lo, hi = int(sp_range[i, 0]), int(sp_range[i, 1])
        xs = x_nchw[:, lo:hi + 1, :, :]
        w = jnp.asarray(weights_per_band[i], dtype=jnp.float32)  # (len_band,)
        conv = jnp.einsum("nchw,c->nhw", xs, w)[:, None, :, :]   # 1x1 conv, 1 out ch
        outs.append(conv / w.sum())
    return jnp.clip(jnp.concatenate(outs, axis=1), 0.0, 1.0)


if __name__ == "__main__":
    key = jax.random.PRNGKey(0)

    # Module configuration: hsi_channels=16 hyperspectral bands grouped into
    # msi_channels=4 bands (consistent with the module's structure).
    hsi_channels = 16
    sp_range = np.array([[0, 3], [4, 7], [8, 11], [12, 15]], dtype=np.int64)
    msi_channels = sp_range.shape[0]

    # Deterministic "conv weights": one (len_band,) vector per 1x1 conv, positive
    # so the band-sum division is well conditioned (synthetic init, no checkpoint).
    k_w, k_x = jax.random.split(key)
    weights_per_band = []
    for i in range(msi_channels):
        k_w, sub = jax.random.split(k_w)
        length = int(sp_range[i, 1] - sp_range[i, 0] + 1)
        weights_per_band.append(
            jax.random.uniform(sub, (length,), jnp.float32, minval=0.1, maxval=1.0))

    # Test 1: NCHW, batch=2, hsi_channels=16, spatial=16x16 (HW multiple of 128).
    x = jax.random.uniform(k_x, (2, hsi_channels, 16, 16), jnp.float32)
    out = jax.block_until_ready(convolution_hr2msi_pallas(x, weights_per_band, sp_range))
    ref = convolution_hr2msi_ref(x, weights_per_band, sp_range)
    assert out.shape == (2, msi_channels, 16, 16)
    np.testing.assert_allclose(np.asarray(out), np.asarray(ref), rtol=1e-5, atol=1e-5)

    # Test 2: HW=144 with tile_pixels=128 -> exercises a ragged (masked) last
    # pixel block, verifying the no-padding boundary handling.
    k_x2 = jax.random.split(k_x)[0]
    x2 = jax.random.uniform(k_x2, (2, hsi_channels, 12, 12), jnp.float32)
    out2 = jax.block_until_ready(
        convolution_hr2msi_pallas(x2, weights_per_band, sp_range, tile_pixels=128))
    ref2 = convolution_hr2msi_ref(x2, weights_per_band, sp_range)
    assert out2.shape == (2, msi_channels, 12, 12)
    np.testing.assert_allclose(np.asarray(out2), np.asarray(ref2), rtol=1e-5, atol=1e-5)

    print("KERNEL_OK")
</pallas_src>

<mosaic_0001>
module attributes {stable_mosaic.version = 11 : i64} {
  func.func @hr2msi_kernel(%arg0: i32, %arg1: i32, %arg2: memref<4x16xf32, #tpu.memory_space<vmem>>, %arg3: memref<1x16x256xf32, #tpu.memory_space<vmem>>, %arg4: memref<1x4x256xf32, #tpu.memory_space<vmem>>) attributes {dimension_semantics = [#tpu.dimension_semantics<parallel>, #tpu.dimension_semantics<parallel>], iteration_bounds = array<i64: 2, 1>, scalar_prefetch = 0 : i64, scratch_operands = 0 : i64, tpu.core_type = #tpu.core_type<tc>, window_params = [{pipeline_mode = #tpu.pipeline_mode<synchronous>, transform_indices = @transform_0, window_bounds = array<i64: 4, 16>}, {transform_indices = @transform_1, window_bounds = array<i64: 1, 16, 256>}, {transform_indices = @transform_2, window_bounds = array<i64: 1, 4, 256>}]} {
    %c0 = arith.constant 0 : index
    %c0_0 = arith.constant 0 : index
    %0 = vector.load %arg2[%c0, %c0_0] : memref<4x16xf32, #tpu.memory_space<vmem>>, vector<4x16xf32>
    %c0_1 = arith.constant 0 : index
    %c0_2 = arith.constant 0 : index
    %c0_3 = arith.constant 0 : index
    %1 = vector.load %arg3[%c0_1, %c0_2, %c0_3] : memref<1x16x256xf32, #tpu.memory_space<vmem>>, vector<1x16x256xf32>
    %2 = vector.shape_cast %1 : vector<1x16x256xf32> to vector<16x256xf32>
    %cst = arith.constant dense<0.000000e+00> : vector<4x256xf32>
    %3 = tpu.matmul %0, %2, %cst {dimension_numbers = #tpu.dot_dimension_numbers<[1], [0], [0], [1], [0, 0, 1, 1], [], []>} : vector<4x16xf32>, vector<16x256xf32>, vector<4x256xf32> -> vector<4x256xf32>
    %cst_4 = arith.constant 0.000000e+00 : f32
    %cst_5 = arith.constant 1.000000e+00 : f32
    %4 = vector.broadcast %cst_4 : f32 to vector<4x256xf32>
    %5 = arith.maximumf %4, %3 : vector<4x256xf32>
    %6 = vector.broadcast %cst_5 : f32 to vector<4x256xf32>
    %7 = arith.minimumf %6, %5 : vector<4x256xf32>
    %c0_6 = arith.constant 0 : index
    %c0_7 = arith.constant 0 : index
    %c0_8 = arith.constant 0 : index
    %8 = vector.load %arg4[%c0_6, %c0_7, %c0_8] : memref<1x4x256xf32, #tpu.memory_space<vmem>>, vector<1x4x256xf32>
    %9 = vector.shape_cast %8 : vector<1x4x256xf32> to vector<4x256xf32>
    %10 = vector.shape_cast %7 : vector<4x256xf32> to vector<1x4x256xf32>
    tpu.vector_store %arg4[%c0_6, %c0_7, %c0_8], %10 {strides = array<i32>} : memref<1x4x256xf32, #tpu.memory_space<vmem>>, vector<1x4x256xf32>,
    return
  }
  func.func @transform_0(%arg0: i32, %arg1: i32) -> (i32, i32) {
    %c0_i32 = arith.constant 0 : i32
    %c0_i32_0 = arith.constant 0 : i32
    %c0_i32_1 = arith.constant 0 : i32
    return %c0_i32, %c0_i32_0 : i32, i32
  }
  func.func @transform_1(%arg0: i32, %arg1: i32) -> (i32, i32, i32) {
    %c0_i32 = arith.constant 0 : i32
    %c0_i32_0 = arith.constant 0 : i32
    return %arg0, %c0_i32, %arg1 : i32, i32, i32
  }
  func.func @transform_2(%arg0: i32, %arg1: i32) -> (i32, i32, i32) {
    %c0_i32 = arith.constant 0 : i32
    %c0_i32_0 = arith.constant 0 : i32
    return %arg0, %c0_i32, %arg1 : i32, i32, i32
  }
}

</mosaic_0001>

<llo_original>
// kernel: tpu_custom_call.1
$region0: #{tpu_custom_call.1}
  #allocation0 [shape = 'u32[]', space=smem, size = 0x4, offset = 0x4, fixed_abs, tag = 'smem constant byte address 0x4 - core index']
  #allocation1 [shape = 'u32[144,128]{1,0:T(1,128)}', space=vmem, size = 0x12000, scoped, tag = 'internal scratch']
  %s0 = inlined_call_operand.hbm [shape: f32[4,16], index: 0, kind: input, shape index: {}]
  %s1 = inlined_call_operand.hbm [shape: f32[2,16,256], index: 1, kind: input, shape index: {}]
  %s2 = inlined_call_operand.hbm [shape: f32[2,4,256], index: 2, kind: output, shape index: {}]
  %s3 = sld [smem:[#allocation0]]
  $region49: #{tpu_custom_call.1} parent=0
    _
  %s5 = ssub.s32 1, %s3
  %s6 = scalar_select 0, %s5, %s3
  $region1: #{tpu_custom_call.1} parent=0
    #allocation2 [shape = 'u8[2048]{0}', space=vmem, size = 0x800, scoped, tag = 'input window, operand 0, single buffered']
    #allocation3 [shape = 's32[2]{0}', space=sflag, size = 0x8, scoped, tag = 'scoped memory for tpu_custom_call.1']
    #allocation4 [shape = 's32[2]{0}', space=sflag, size = 0x8, scoped, tag = 'scoped memory for tpu_custom_call.1']
    #allocation5 [shape = 'u8[32768]{0}', space=vmem, size = 0x8000, scoped, tag = 'input window, operand 1']
    #allocation6 [shape = 's32[2]{0}', space=sflag, size = 0x8, scoped, tag = 'scoped memory for tpu_custom_call.1']
    #allocation7 [shape = 'u8[8192]{0}', space=vmem, size = 0x2000, scoped, tag = 'output window, operand 0']
    %7 = vsyncpa [#allocation3], 0
    %8 = vsyncpa [#allocation6], 0
    %s9 = scalar_lea.sflag [#allocation6], 1
    %10 = vsyncpa %s9, 0
    %11 = vsyncpa [#allocation4], 0
    %s12 = scalar_lea.sflag [#allocation4], 1
    %13 = vsyncpa %s12, 0
    loop: start=0, step=1, limit=4
    $region2: #{tpu_custom_call.1} parent=1 // loop_pre_header
      _
    $region3: #{tpu_custom_call.1} parent=1 // loop_header
      %s15 = sphi 0, %s19
      %p16 = scmp.ge.s32.totalorder %s15, 4
      %s22 = sphi 0, %s34
      %s23 = sphi 0, %s30
      %s24 = sphi 0, %s22
      %s25 = sphi 0, %s23
      %s26 = sphi 0, %s24
      %s27 = sphi 0, %s25
      %s35 = sphi 0, %s35
      %s37 = sphi 0, %s35
      %s38 = sphi 0, %s37
      %s52 = sphi 0, %s38
      %s60 = sphi 0, %s62
      %s63 = sphi 0, %s60
      %s64 = sphi 0, %s63
      %s80 = sphi 0, %s64
      %s88 = sphi 0, %s90
      %s91 = sphi 0, %s88
      %s92 = sphi 0, %s91
      %s108 = sphi 0, %s92
    $region4: #{tpu_custom_call.1} parent=1 // loop_header_branch
      %18 = sbr.rel (%p16) target = $region8
    $region5: #{tpu_custom_call.1} parent=1 // loop_body
      %s20 = ssub.s32 %s15, 1
      %s21 = ssub.s32 %s15, 2
      %s28 = sadd.s32 1, %s23
      %p29 = scmp.ge.s32.totalorder %s28, 1
      %s30 = scalar_select %p29, 0, %s28
      %s31 = sadd.s32 1, %s22
      %s32 = scalar_select %p29, %s31, %s22
      %p33 = scmp.ge.s32.totalorder %s32, 2
      %s34 = scalar_select %p33, 0, %s32
      %s36 = sadd.s32 %s35, 1
      %p39 = scmp.eq.s32.totalorder %s15, 1
      %p40 = scmp.ne.s32.totalorder %s35, %s37
      %p41 = scmp.eq.s32.totalorder %s15, 0
      %p42 = por %p40, %p41
      %p43 = scmp.ne.s32.totalorder %s35, %s37
      %p44 = scmp.eq.s32.totalorder %s20, 1
      %p45 = por %p43, %p44
      %p46 = scmp.ne.s32.totalorder %s37, %s38
      %p47 = scmp.eq.s32.totalorder %s20, 0
      %p48 = por %p46, %p47
      %p49 = scmp.ne.s32.totalorder %s37, %s38
      %p50 = scmp.eq.s32.totalorder %s21, 1
      %p51 = por %p49, %p50
      %p53 = scmp.ne.s32.totalorder %s38, %s52
      %p54 = scmp.eq.s32.totalorder %s21, 0
      %p55 = por %p53, %p54
      %s56 = ssub.s32 %s22, %s34
      %s57 = ssub.s32 %s23, %s30
      %s58 = sor.u32 %s56, %s57
      %p59 = scmp.eq.s32.totalorder %s58, 0
      %s61 = sadd.s32 %s60, 1
      %s62 = scalar_select %p59, %s60, %s61
      %p65 = pneg %p59
      %p66 = scmp.eq.s32.totalorder %s15, 1
      %p67 = por %p65, %p66
      %p68 = scmp.ne.s32.totalorder %s60, %s63
      %p69 = scmp.eq.s32.totalorder %s15, 0
      %p70 = por %p68, %p69
      %p71 = scmp.ne.s32.totalorder %s60, %s63
      %p72 = scmp.eq.s32.totalorder %s20, 1
      %p73 = por %p71, %p72
      %p74 = scmp.ne.s32.totalorder %s63, %s64
      %p75 = scmp.eq.s32.totalorder %s20, 0
      %p76 = por %p74, %p75
      %p77 = scmp.ne.s32.totalorder %s63, %s64
      %p78 = scmp.eq.s32.totalorder %s21, 1
      %p79 = por %p77, %p78
      %p81 = scmp.ne.s32.totalorder %s64, %s80
      %p82 = scmp.eq.s32.totalorder %s21, 0
      %p83 = por %p81, %p82
      %s84 = ssub.s32 %s22, %s34
      %s85 = ssub.s32 %s23, %s30
      %s86 = sor.u32 %s84, %s85
      %p87 = scmp.eq.s32.totalorder %s86, 0
      %s89 = sadd.s32 %s88, 1
      %s90 = scalar_select %p87, %s88, %s89
      %p93 = pneg %p87
      %p94 = scmp.eq.s32.totalorder %s15, 1
      %p95 = por %p93, %p94
      %p96 = scmp.ne.s32.totalorder %s88, %s91
      %p97 = scmp.eq.s32.totalorder %s15, 0
      %p98 = por %p96, %p97
      %p99 = scmp.ne.s32.totalorder %s88, %s91
      %p100 = scmp.eq.s32.totalorder %s20, 1
      %p101 = por %p99, %p100
      %p102 = scmp.ne.s32.totalorder %s91, %s92
      %p103 = scmp.eq.s32.totalorder %s20, 0
      %p104 = por %p102, %p103
      %p105 = scmp.ne.s32.totalorder %s91, %s92
      %p106 = scmp.eq.s32.totalorder %s21, 1
      %p107 = por %p105, %p106
      %p109 = scmp.ne.s32.totalorder %s92, %s108
      %p110 = scmp.eq.s32.totalorder %s21, 0
      %p111 = por %p109, %p110
      %p112 = scmp.le.s32.totalorder 1, %s15
      %p113 = scmp.lt.s32.totalorder %s15, 3
      %p114 = pnand %p112, %p113
      %p115 = pneg %p114
      // Predicated region
      $region9: #{tpu_custom_call.1} parent=5 // pred_check
        _
      $region10: #{tpu_custom_call.1} parent=5 // pred_check_branch
        %117 = sbr.rel (%p114) target = $region12
      $region11: #{tpu_custom_call.1} parent=5 // pred_region
        %s118 = ssub.s32 %s15, 1
        // Predicated region
        $region13: #{tpu_custom_call.1} parent=11 // pred_check
          %p119 = pneg %p48
        $region14: #{tpu_custom_call.1} parent=11 // pred_check_branch
          %121 = sbr.rel (%p119) target = $region16
        $region15: #{tpu_custom_call.1} parent=11 // pred_region
          %s123 = ssub.s32 64, 64
          %124 = vsyncadd [#allocation3], %s123
          %s126 = sshll.u32 [#allocation2], 4
          %s127 = int_to_ptr.vmem [resolvable:$true] %s126
          %129 = dma.hbm_to_vmem [thread:$0]  %s0, 64, %s127, [#allocation3]
        $region16: #{tpu_custom_call.1} parent=11 // pred_fallthru
          _
      $region12: #{tpu_custom_call.1} parent=5 // pred_fallthru
        _
      %p130 = scmp.lt.s32.totalorder %s15, 2
      // Predicated region
      $region17: #{tpu_custom_call.1} parent=5 // pred_check
        %p131 = pneg %p130
      $region18: #{tpu_custom_call.1} parent=5 // pred_check_branch
        %133 = sbr.rel (%p131) target = $region20
      $region19: #{tpu_custom_call.1} parent=5 // pred_region
        // Predicated region
        $region21: #{tpu_custom_call.1} parent=19 // pred_check
          %p134 = pneg %p70
        $region22: #{tpu_custom_call.1} parent=19 // pred_check_branch
          %136 = sbr.rel (%p134) target = $region24
        $region23: #{tpu_custom_call.1} parent=19 // pred_region
          %s137 = sand.u32 %s60, 1
          %s138 = scalar_lea.sflag [#allocation6], %s137
          %s139 = sand.u32 %s60, 1
          %s140 = smul.addr %s139, 32
          %s141 = scalar_lea.vmem [#allocation5], %s140
          %s142 = smul.u32 2, %s23
          %s144 = ssub.s32 512, 512
          %145 = vsyncadd %s138, %s144
          %s146 = smul.addr %s22, 4
          %s147 = sadd.s32 %s142, %s146
          %s148 = smul.addr %s147, 128
          %s149 = scalar_lea.hbm %s1, %s148
          %s150 = sshll.u32 %s141, 4
          %s151 = int_to_ptr.vmem [resolvable:$true] %s150
          %156 = dma.hbm_to_vmem [thread:$0]  %s149, 512, %s151, %s138, 256, 256, 16
        $region24: #{tpu_custom_call.1} parent=19 // pred_fallthru
          _
      $region20: #{tpu_custom_call.1} parent=5 // pred_fallthru
        _
      %p157 = scmp.le.s32.totalorder 1, %s15
      %p158 = scmp.lt.s32.totalorder %s15, 3
      %p159 = pnand %p157, %p158
      %p160 = pneg %p159
      // Predicated region
      $region25: #{tpu_custom_call.1} parent=5 // pred_check
        _
      $region26: #{tpu_custom_call.1} parent=5 // pred_check_branch
        %162 = sbr.rel (%p159) target = $region28
      $region27: #{tpu_custom_call.1} parent=5 // pred_region
        %s163 = ssub.s32 %s15, 1
        // Predicated region
        $region29: #{tpu_custom_call.1} parent=27 // pred_check
          %p164 = pneg %p48
        $region30: #{tpu_custom_call.1} parent=27 // pred_check_branch
          %166 = sbr.rel (%p164) target = $region32
        $region31: #{tpu_custom_call.1} parent=27 // pred_region
          %167 = dma.done [#allocation3], 64
        $region32: #{tpu_custom_call.1} parent=27 // pred_fallthru
          _
        %s168 = sand.u32 %s63, 1
        %s169 = scalar_lea.sflag [#allocation6], %s168
        %s170 = sand.u32 %s63, 1
        %s171 = smul.addr %s170, 32
        %s172 = scalar_lea.vmem [#allocation5], %s171
        // Predicated region
        $region33: #{tpu_custom_call.1} parent=27 // pred_check
          %p173 = pneg %p76
        $region34: #{tpu_custom_call.1} parent=27 // pred_check_branch
          %175 = sbr.rel (%p173) target = $region36
        $region35: #{tpu_custom_call.1} parent=27 // pred_region
          %176 = dma.done %s169, 512
        $region36: #{tpu_custom_call.1} parent=27 // pred_fallthru
          _
        %p177 = pneg %p48
        %p178 = pneg %p45
        %s179 = sand.u32 %s63, 1
        %s180 = scalar_lea.sflag [#allocation6], %s179
        %s181 = sand.u32 %s63, 1
        %s182 = smul.addr %s181, 32
        %s183 = scalar_lea.vmem [#allocation5], %s182
        %p184 = pneg %p76
        %p185 = pneg %p73
        %p186 = pneg %p104
        %p187 = pneg %p101
        %s188 = sand.u32 %s91, 1
        %s189 = scalar_lea.sflag [#allocation4], %s188
        %s190 = sand.u32 %s91, 1
        %s191 = smul.addr %s190, 8
        %s192 = scalar_lea.vmem [#allocation7], %s191
        %s193 = smul.u32 2, %s25
        %s194 = smul.u32 2, %s25
        %v195 = vld [vmem:[#allocation2] sm:$0xf]
        %v196 = vld [vmem:[%s172] sm:$0xff]
        %v197 = vld [vmem:[%s172 + $0x8] sm:$0xff]
        %v198 = vld [vmem:[%s172 + $0x10] sm:$0xff]
        %v199 = vld [vmem:[%s172 + $0x18] sm:$0xff]
        %vm200 = vcmask 130048
        %v202 = vsel %vm200, %v195, 0
        %204 = vmatprep.subr.mxu0 0.0
        %205 = vmatpush1.msra.mxu0 0.0
        %206 = vmatprep.subr.mxu0 0.0
        %207 = vmatpush1.msra.mxu0 0.0
        %208 = vmatprep.subr.mxu0 0.0
        %209 = vmatpush1.msra.mxu0 0.0
        %210 = vmatprep.subr.mxu0 0.0
        %211 = vmatpush1.msra.mxu0 0.0
        %212 = vmatprep.subr.mxu0 0.0
        %213 = vmatpush1.msra.mxu0 0.0
        %214 = vmatprep.subr.mxu0 0.0
        %215 = vmatpush1.msra.mxu0 0.0
        %216 = vmatprep.subr.mxu0 0.0
        %217 = vmatpush1.msra.mxu0 0.0
        %218 = vmatprep.subr.mxu0 0.0
        %219 = vmatpush1.msra.mxu0 0.0
        %220 = vmatprep.subr.mxu0 0.0
        %221 = vmatpush1.msra.mxu0 0.0
        %222 = vmatprep.subr.mxu0 0.0
        %223 = vmatpush1.msra.mxu0 0.0
        %224 = vmatprep.subr.mxu0 0.0
        %225 = vmatpush1.msra.mxu0 0.0
        %226 = vmatprep.subr.mxu0 0.0
        %227 = vmatpush1.msra.mxu0 0.0
        %228 = vmatprep.subr.mxu0 0.0
        %229 = vmatpush1.msra.mxu0 0.0
        %230 = vmatprep.subr.mxu0 0.0
        %231 = vmatpush1.msra.mxu0 0.0
        %232 = vmatprep.subr.mxu0 %v199
        %233 = vmatpush1.msra.mxu0 %v198
        %234 = vmatprep.subr.mxu0 %v197
        %235 = vmatpush1.msra.mxu0 %v196
        %236 = vmatprep.subr.mxu0 0.0
        %237 = vmatpush2.msra.mxu0 0.0
        %238 = vmatprep.subr.mxu0 0.0
        %239 = vmatpush2.msra.mxu0 0.0
        %240 = vmatprep.subr.mxu0 0.0
        %241 = vmatpush2.msra.mxu0 0.0
        %242 = vmatprep.subr.mxu0 0.0
        %243 = vmatpush2.msra.mxu0 0.0
        %244 = vmatprep.subr.mxu0 0.0
        %245 = vmatpush2.msra.mxu0 0.0
        %246 = vmatprep.subr.mxu0 0.0
        %247 = vmatpush2.msra.mxu0 0.0
        %248 = vmatprep.subr.mxu0 0.0
        %249 = vmatpush2.msra.mxu0 0.0
        %250 = vmatprep.subr.mxu0 0.0
        %251 = vmatpush2.msra.mxu0 0.0
        %252 = vmatprep.subr.mxu0 0.0
        %253 = vmatpush2.msra.mxu0 0.0
        %254 = vmatprep.subr.mxu0 0.0
        %255 = vmatpush2.msra.mxu0 0.0
        %256 = vmatprep.subr.mxu0 0.0
        %257 = vmatpush2.msra.mxu0 0.0
        %258 = vmatprep.subr.mxu0 0.0
        %259 = vmatpush2.msra.mxu0 0.0
        %260 = vmatprep.subr.mxu0 0.0
        %261 = vmatpush2.msra.mxu0 0.0
        %262 = vmatprep.subr.mxu0 0.0
        %263 = vmatpush2.msra.mxu0 0.0
        %264 = vmatprep.subr.mxu0 0.0
        %265 = vmatpush2.msra.mxu0 0.0
        %266 = vmatprep.subr.mxu0 0.0
        %267 = vmatpush2.msra.mxu0 0.0
        %268 = vmatprep.mubr.f32.mxu0 0.0
        %269 = vmatmul.mubr.f32.gmra.mxu0 %v202
        %v270 = vpop.f32.mrf.mxu0
        %v271 = vadd.f32 0.0, %v270
        %v272 = vpop.f32.mrf.mxu0
        %v273 = vadd.f32 0.0, %v272
        %274 = vdwg.mxu0
        %v275 = vmax.f32 %v271, 0.0
        %v276 = vmax.f32 %v273, 0.0
        %v277 = vmin.f32 %v275, 1.0
        %v278 = vmin.f32 %v276, 1.0
        %v281 = vcombine.low %v277, %v278
        %283 = vst [vmem:[%s192] sm:$0xff] %v281
        %s284 = sand.u32 %s91, 1
        %s285 = scalar_lea.sflag [#allocation4], %s284
        %s286 = sand.u32 %s91, 1
        %s287 = smul.addr %s286, 8
        %s288 = scalar_lea.vmem [#allocation7], %s287
        // Predicated region
        $region37: #{tpu_custom_call.1} parent=27 // pred_check
          %p289 = pneg %p101
        $region38: #{tpu_custom_call.1} parent=27 // pred_check_branch
          %291 = sbr.rel (%p289) target = $region40
        $region39: #{tpu_custom_call.1} parent=27 // pred_region
          %s292 = smul.u32 2, %s25
          %s294 = ssub.s32 128, 128
          %295 = vsyncadd %s285, %s294
          %s296 = smul.addr %s24, 2
          %s297 = sadd.s32 %s292, %s296
          %s298 = smul.addr %s297, 64
          %s299 = scalar_lea.hbm %s2, %s298
          %s301 = sshll.u32 %s288, 4
          %s302 = int_to_ptr.vmem [resolvable:$true] %s301
          %304 = dma.vmem_to_hbm [thread:$0]  %s302, 128, %s299, %s285
        $region40: #{tpu_custom_call.1} parent=27 // pred_fallthru
          _
      $region28: #{tpu_custom_call.1} parent=5 // pred_fallthru
        _
      %p305 = scmp.le.s32.totalorder 2, %s15
      // Predicated region
      $region41: #{tpu_custom_call.1} parent=5 // pred_check
        %p306 = pneg %p305
      $region42: #{tpu_custom_call.1} parent=5 // pred_check_branch
        %308 = sbr.rel (%p306) target = $region44
      $region43: #{tpu_custom_call.1} parent=5 // pred_region
        %s309 = ssub.s32 %s15, 2
        // Predicated region
        $region45: #{tpu_custom_call.1} parent=43 // pred_check
          %p310 = pneg %p107
        $region46: #{tpu_custom_call.1} parent=43 // pred_check_branch
          %312 = sbr.rel (%p310) target = $region48
        $region47: #{tpu_custom_call.1} parent=43 // pred_region
          %s313 = sand.u32 %s92, 1
          %s314 = scalar_lea.sflag [#allocation4], %s313
          %s315 = sand.u32 %s92, 1
          %s316 = smul.addr %s315, 8
          %s317 = scalar_lea.vmem [#allocation7], %s316
          %318 = dma.done %s314, 128
        $region48: #{tpu_custom_call.1} parent=43 // pred_fallthru
          _
      $region44: #{tpu_custom_call.1} parent=5 // pred_fallthru
        _
    $region6: #{tpu_custom_call.1} parent=1 // loop_footer
      %s19 = sadd.s32 1, %s15
    $region7: #{tpu_custom_call.1} parent=1 // loop_footer_branch
      %14 = sbr.rel target = $region3
    $region8: #{tpu_custom_call.1} parent=1 // loop_exit
      _
    %319 = vsyncpa [#allocation3], 1
    %s320 = scalar_lea.sflag [#allocation3], 1
    %321 = vsyncpa %s320, 1
    %322 = vsyncpa [#allocation6], 1
    %s323 = scalar_lea.sflag [#allocation6], 1
    %324 = vsyncpa %s323, 1
    %325 = vsyncpa [#allocation4], 1
    %s326 = scalar_lea.sflag [#allocation4], 1
    %327 = vsyncpa %s326, 1

</llo_original>
